<compile_context>
chip_gen: v7x
topology: tpu7x:2x2x1
jax: 0.10.0
libtpu: 0.0.40
codegen_flags: <defaults>
</compile_context>

<pallas_src>
import math
import functools

import jax
import jax.numpy as jnp
from jax.experimental import pallas as pl
from jax.experimental.pallas import tpu as pltpu

DTYPE = jnp.float32
_LANE = 128


# ----------------------------------------------------------------------------
# PE table construction (buffer init, mirrors the PyTorch __init__)
# ----------------------------------------------------------------------------

def positional_encoding_table(max_len, d_model):
    pos = jnp.arange(max_len, dtype=jnp.float32)[:, None]
    div = jnp.exp(jnp.arange(0, d_model, 2, dtype=jnp.float32)
                  * (-math.log(10000.0) / d_model))
    pe = jnp.zeros((max_len, d_model), DTYPE)
    pe = pe.at[:, 0::2].set(jnp.sin(pos * div))
    # Slice div so odd d_model works too (PyTorch even-d_model case identical).
    pe = pe.at[:, 1::2].set(jnp.cos(pos * div[: d_model // 2]))
    return pe  # (max_len, d_model)


# ----------------------------------------------------------------------------
# Pallas kernel: purely memory-bound elementwise add
# ----------------------------------------------------------------------------

def _add_pe_kernel(x_ref, pe_ref, o_ref):
    # x block: (tb, tc); pe block: (1, tc) -> broadcasts over the batch rows.
    o_ref[...] = x_ref[...] + pe_ref[...]


def _tpu_vmem_capacity_bytes():
    """Generation-aware VMEM capacity (conservative fallback = v7x 64 MiB)."""
    try:
        cap = getattr(pltpu.get_tpu_info(), "vmem_capacity_bytes", None)
        if cap:
            return int(cap)
    except Exception:
        pass
    return 64 * 1024 * 1024


def _pick_tiles(batch, flat, itemsize, budget_bytes):
    """Pick (tb, tc): batch rows and lane-flat columns per block.

    Double-buffered footprint ~= 2 * tc * (2*tb + 1) * itemsize.
    tc is always a multiple of 128 so every store is a full-lane vst.
    """
    tb = batch
    tc = budget_bytes // (2 * (2 * tb + 1) * itemsize)
    tc = max(_LANE, (tc // _LANE) * _LANE)
    flat_padded = pl.cdiv(flat, _LANE) * _LANE
    tc = min(tc, flat_padded)
    # Huge-batch fallback: shrink the batch tile (multiples of 8) rather than
    # shrinking the lane-dense column tile below 128.
    while tb > 8 and 2 * tc * (2 * tb + 1) * itemsize > budget_bytes:
        tb = max(8, ((tb // 2) // 8) * 8)
    return tb, tc


def positional_encoding(x, pe, *, donate_x=False):
    """x: (B, S, D); pe: (max_len, D). Returns x + pe[None, :S, :]."""
    B, S, D = x.shape
    max_len, pd = pe.shape
    assert pd == D and max_len >= S, (pe.shape, x.shape)

    itemsize = jnp.dtype(x.dtype).itemsize
    flat = S * D

    # Free (bitcast) reshapes: last dim becomes lane-flat so stores are
    # unmasked 128-lane vst even for small / non-multiple-of-128 d_model.
    # No pe[:S] slice is materialized; the grid only covers rows < S.
    x2 = x.reshape(B, flat)
    pe2 = pe.astype(x.dtype).reshape(1, max_len * D)

    cap = _tpu_vmem_capacity_bytes()
    budget = min(cap // 8, 8 * 1024 * 1024)            # total double-buffered target
    tb, tc = _pick_tiles(B, flat, itemsize, budget)
    n_c = pl.cdiv(flat, tc)
    n_b = pl.cdiv(B, tb)

    # One add per element; pe is read once (not once per batch element).
    cost = pl.CostEstimate(
        flops=B * S * D,
        transcendentals=0,
        bytes_accessed=(2 * B * S * D + S * D) * itemsize,
    )

    extra = {}
    if donate_x:
        # Only beneficial when the caller actually donates x; otherwise XLA
        # would insert a defensive copy, so keep it opt-in.
        extra["input_output_aliases"] = {0: 0}

    out2 = pl.pallas_call(
        _add_pe_kernel,
        # Batch axis innermost: pe's block index (0, c) is unchanged across
        # consecutive steps, so Pallas never re-DMAs the PE tile.
        grid=(n_c, n_b),
        out_shape=jax.ShapeDtypeStruct((B, flat), x.dtype),
        in_specs=[
            pl.BlockSpec((tb, tc), lambda c, b: (b, c)),
            pl.BlockSpec((1, tc), lambda c, b: (0, c)),
        ],
        out_specs=pl.BlockSpec((tb, tc), lambda c, b: (b, c)),
        compiler_params=pltpu.CompilerParams(
            dimension_semantics=("parallel", "parallel"),
            vmem_limit_bytes=min(cap // 2, 32 * 1024 * 1024),
        ),
        cost_estimate=cost,
        **extra,
    )(x2, pe2)

    return out2.reshape(B, S, D)


# ----------------------------------------------------------------------------
# Module-equivalent wrapper
# ----------------------------------------------------------------------------

class PositionalEncoding:
    def __init__(self, d_model, max_len=5000):
        self.pe = positional_encoding_table(max_len, d_model)

    def __call__(self, x):
        return positional_encoding(x, self.pe)


# ----------------------------------------------------------------------------

if __name__ == "__main__":
    BATCH = 2
    SEQ = 8
    D_MODEL = 32
    MAX_LEN = 5000  # PyTorch default

    key = jax.random.PRNGKey(0)
    x = jax.random.normal(key, (BATCH, SEQ, D_MODEL), DTYPE)

    module = PositionalEncoding(D_MODEL, max_len=MAX_LEN)
    fwd = jax.jit(functools.partial(positional_encoding, pe=module.pe))
    out = fwd(x)
    jax.block_until_ready(out)

    # Pure-JAX reference check.
    ref = x + module.pe[None, :SEQ, :]
    assert out.shape == (BATCH, SEQ, D_MODEL), out.shape
    assert bool(jnp.all(jnp.isfinite(out)))
    assert bool(jnp.allclose(out, ref, atol=1e-6, rtol=1e-6))
    print("KERNEL_OK")
</pallas_src>

<mosaic_0001>
module attributes {stable_mosaic.version = 11 : i64} {
  func.func @_add_pe_kernel(%arg0: i32, %arg1: i32, %arg2: memref<2x256xf32, #tpu.memory_space<vmem>>, %arg3: memref<1x256xf32, #tpu.memory_space<vmem>>, %arg4: memref<2x256xf32, #tpu.memory_space<vmem>>) attributes {dimension_semantics = [#tpu.dimension_semantics<parallel>, #tpu.dimension_semantics<parallel>], iteration_bounds = array<i64: 1, 1>, scalar_prefetch = 0 : i64, scratch_operands = 0 : i64, tpu.core_type = #tpu.core_type<tc>, window_params = [{transform_indices = @transform_0, window_bounds = array<i64: 2, 256>}, {transform_indices = @transform_1, window_bounds = array<i64: 1, 256>}, {transform_indices = @transform_2, window_bounds = array<i64: 2, 256>}]} {
    %c0 = arith.constant 0 : index
    %c0_0 = arith.constant 0 : index
    %0 = vector.load %arg2[%c0, %c0_0] : memref<2x256xf32, #tpu.memory_space<vmem>>, vector<2x256xf32>
    %c0_1 = arith.constant 0 : index
    %c0_2 = arith.constant 0 : index
    %1 = vector.load %arg3[%c0_1, %c0_2] : memref<1x256xf32, #tpu.memory_space<vmem>>, vector<1x256xf32>
    %2 = vector.broadcast %1 : vector<1x256xf32> to vector<2x256xf32>
    %3 = arith.addf %0, %2 : vector<2x256xf32>
    %c0_3 = arith.constant 0 : index
    %c0_4 = arith.constant 0 : index
    %4 = vector.load %arg4[%c0_3, %c0_4] : memref<2x256xf32, #tpu.memory_space<vmem>>, vector<2x256xf32>
    tpu.vector_store %arg4[%c0_3, %c0_4], %3 {strides = array<i32>} : memref<2x256xf32, #tpu.memory_space<vmem>>, vector<2x256xf32>,
    return
  }
  func.func @transform_0(%arg0: i32, %arg1: i32) -> (i32, i32) {
    %c0_i32 = arith.constant 0 : i32
    return %arg1, %arg0 : i32, i32
  }
  func.func @transform_1(%arg0: i32, %arg1: i32) -> (i32, i32) {
    %c0_i32 = arith.constant 0 : i32
    %c0_i32_0 = arith.constant 0 : i32
    return %c0_i32, %arg0 : i32, i32
  }
  func.func @transform_2(%arg0: i32, %arg1: i32) -> (i32, i32) {
    %c0_i32 = arith.constant 0 : i32
    return %arg1, %arg0 : i32, i32
  }
}

</mosaic_0001>

<llo_original>
// kernel: positional_encoding.1
$region0: #{positional_encoding.1}
  #allocation0 [shape = 'u32[]', space=smem, size = 0x4, offset = 0x4, fixed_abs, tag = 'smem constant byte address 0x4 - core index']
  #allocation1 [shape = 'u32[144,128]{1,0:T(1,128)}', space=vmem, size = 0x12000, scoped, tag = 'internal scratch']
  %s0 = inlined_call_operand.vmem [shape: f32[2,256], index: 0, kind: input, shape index: {}]
  %s1 = inlined_call_operand.hbm [shape: f32[1,160000], index: 1, kind: input, shape index: {}]
  %s2 = inlined_call_operand.vmem [shape: f32[2,256], index: 2, kind: output, shape index: {}]
  %s3 = sld [smem:[#allocation0]]
  $region22: #{positional_encoding.1} parent=0
    _
  %s5 = ssub.s32 1, %s3
  %s6 = scalar_select 0, %s5, %s3
  $region1: #{positional_encoding.1} parent=0
    #allocation2 [shape = 'u8[1024]{0}', space=vmem, size = 0x400, scoped, tag = 'input window, operand 1, single buffered']
    #allocation3 [shape = 's32[1]{0}', space=sflag, size = 0x4, scoped, tag = 'scoped memory for positional_encoding.1']
    %7 = vsyncpa [#allocation3], 0
    // Predicated region
    $region2: #{positional_encoding.1} parent=1 // pred_check
      _
    $region3: #{positional_encoding.1} parent=1 // pred_check_branch
      %9 = sbr.rel (0) target = $region5
    $region4: #{positional_encoding.1} parent=1 // pred_region
      _
    $region5: #{positional_encoding.1} parent=1 // pred_fallthru
      _
    // Predicated region
    $region6: #{positional_encoding.1} parent=1 // pred_check
      _
    $region7: #{positional_encoding.1} parent=1 // pred_check_branch
      %11 = sbr.rel (0) target = $region9
    $region8: #{positional_encoding.1} parent=1 // pred_region
      %s13 = ssub.s32 32, 32
      %14 = vsyncadd [#allocation3], %s13
      %s16 = sshll.u32 [#allocation2], 4
      %s17 = int_to_ptr.vmem [resolvable:$true] %s16
      %19 = dma.hbm_to_vmem [thread:$0]  %s1, 32, %s17, [#allocation3]
    $region9: #{positional_encoding.1} parent=1 // pred_fallthru
      _
    // Predicated region
    $region10: #{positional_encoding.1} parent=1 // pred_check
      _
    $region11: #{positional_encoding.1} parent=1 // pred_check_branch
      %21 = sbr.rel (0) target = $region13
    $region12: #{positional_encoding.1} parent=1 // pred_region
      %22 = dma.done [#allocation3], 32
    $region13: #{positional_encoding.1} parent=1 // pred_fallthru
      _
    %v23 = vld [vmem:[%s0] sm:$0xf]
    %v24 = vld [vmem:[#allocation2] sm:$0x3]
    %v26 = vlaneseq
    %v27 = vshrl.u32 %v26, 7
    %v28 = vsub.s32 0, %v27
    %v29 = vrot.slane %v24, %v28
    %v30 = vlaneseq
    %v31 = vshrl.u32 %v30, 7
    %v32 = vsub.s32 1, %v31
    %v33 = vrot.slane %v24, %v32
    %v34 = vcombine.low %v29, %v33
    %v36 = vunpack.c.l.s4 1983009808
    %v37 = vunpack.c.0.s8 %v36
    %v38 = vlaneseq
    %v39 = vshrl.u32 %v38, 7
    %v40 = vsub.s32 %v37, %v39
    %v41 = vrot.slane %v34, %v40
    %v43 = vadd.f32 %v23, %v41
    %44 = vst [vmem:[%s2] sm:$0xf] %v43
    // Predicated region
    $region14: #{positional_encoding.1} parent=1 // pred_check
      _
    $region15: #{positional_encoding.1} parent=1 // pred_check_branch
      %46 = sbr.rel (0) target = $region17
    $region16: #{positional_encoding.1} parent=1 // pred_region
      _
    $region17: #{positional_encoding.1} parent=1 // pred_fallthru
      _
    // Predicated region
    $region18: #{positional_encoding.1} parent=1 // pred_check
      _
    $region19: #{positional_encoding.1} parent=1 // pred_check_branch
      %48 = sbr.rel (0) target = $region21
    $region20: #{positional_encoding.1} parent=1 // pred_region
      _
    $region21: #{positional_encoding.1} parent=1 // pred_fallthru
      _
    %49 = vsyncpa [#allocation3], 1

</llo_original>
